<compile_context>
chip_gen: v7x
topology: tpu7x:2x2x1
jax: 0.10.0
libtpu: 0.0.40
codegen_flags: <defaults>
</compile_context>

<pallas_src>
import functools

import jax
import jax.numpy as jnp
from jax.experimental import pallas as pl
from jax.experimental.pallas import tpu as pltpu


RRELU_SLOPE = 0.2   # (lower + upper) / 2 for nn.RReLU(0.1, 0.3) in eval mode
LANE = 128          # TPU lane width; packed params / hidden acts / logits padded to this


def _round_up(n, m):
    return ((n + m - 1) // m) * m


def _rrelu(h):
    return jnp.where(h >= 0.0, h, RRELU_SLOPE * h)


def grlmlp_kernel(x_ref, maskadd_ref, params_ref, out_ref, *, dp):
    """Fused 4-layer MLP + masked log_softmax for one batch tile.

    params_ref layout (bf16, all 128 lanes wide, zero-padded):
      rows [0,        dp)        : W1  (d_in x h1)
      rows [dp,       dp+128)    : W2  (h1   x h1)
      rows [dp+128,   dp+256)    : W3  (h1   x h2)
      rows [dp+256,   dp+384)    : W4  (h2   x d_out)
      rows [dp+384,   dp+392)    : rows 0..3 = b1,b2,b3,b4 (rest zero)
    """
    o2 = dp
    o3 = dp + LANE
    o4 = dp + 2 * LANE
    ob = dp + 3 * LANE

    # Static, 8-aligned slices of the single packed parameter buffer.
    w1 = params_ref[0:dp, :]
    w2 = params_ref[o2:o2 + LANE, :]
    w3 = params_ref[o3:o3 + LANE, :]
    w4 = params_ref[o4:o4 + LANE, :]
    bias = params_ref[ob:ob + 8, :].astype(jnp.float32)   # (8, 128), rows 0..3 used

    x = x_ref[...]                                         # (TB, dp) bf16

    # bf16 MXU matmuls with f32 accumulation; elementwise math in f32.
    h1 = jnp.dot(x, w1, preferred_element_type=jnp.float32) + bias[0:1, :]
    l1 = _rrelu(h1)
    h2 = jnp.dot(l1.astype(jnp.bfloat16), w2,
                 preferred_element_type=jnp.float32) + bias[1:2, :]
    l2 = _rrelu(h2)
    h3 = jnp.dot(l2.astype(jnp.bfloat16), w3,
                 preferred_element_type=jnp.float32) + bias[2:3, :]
    l3 = _rrelu(h3)
    ypred = jnp.dot(l3.astype(jnp.bfloat16), w4,
                    preferred_element_type=jnp.float32) + bias[3:4, :]

    # Additive mask: -inf at masked real columns and at all padded columns.
    logits = ypred + maskadd_ref[...].astype(jnp.float32)

    # log_softmax over the 128 lanes (padded lanes contribute exp(-inf)=0).
    m = jnp.max(logits, axis=-1, keepdims=True)
    s = logits - m
    lse = jnp.log(jnp.sum(jnp.exp(s), axis=-1, keepdims=True))
    out_ref[...] = s - lse


def pack_params(w1t, b1, w2t, b2, w3t, b3, w4t, b4):
    """Pack all Linear params into one lane-dense (rows, 128) bf16 buffer.

    Weights are already transposed to (in, out); everything is zero-padded so
    all hidden activations run 128 lanes wide (zero pad rows/cols are inert).
    """
    d_in = w1t.shape[0]
    dp = _round_up(d_in, 8)
    o2, o3, o4, ob = dp, dp + LANE, dp + 2 * LANE, dp + 3 * LANE
    rows = dp + 3 * LANE + 8

    buf = jnp.zeros((rows, LANE), jnp.float32)
    buf = buf.at[0:w1t.shape[0], 0:w1t.shape[1]].set(w1t)
    buf = buf.at[o2:o2 + w2t.shape[0], 0:w2t.shape[1]].set(w2t)
    buf = buf.at[o3:o3 + w3t.shape[0], 0:w3t.shape[1]].set(w3t)
    buf = buf.at[o4:o4 + w4t.shape[0], 0:w4t.shape[1]].set(w4t)
    buf = buf.at[ob + 0, 0:b1.shape[-1]].set(b1.reshape(-1))
    buf = buf.at[ob + 1, 0:b2.shape[-1]].set(b2.reshape(-1))
    buf = buf.at[ob + 2, 0:b3.shape[-1]].set(b3.reshape(-1))
    buf = buf.at[ob + 3, 0:b4.shape[-1]].set(b4.reshape(-1))
    return buf.astype(jnp.bfloat16)


@functools.partial(jax.jit, static_argnames=("d_out", "tb"))
def grlmlp_forward(x, mask_bool, packed_params, *, d_out, tb=256):
    B, d_in = x.shape
    dp = _round_up(d_in, 8)
    assert packed_params.shape == (dp + 3 * LANE + 8, LANE)

    # Batch tile: multiple of 8; 256 default (v6e/v7x MXU), clamp for small B.
    TB = min(tb, _round_up(B, 8))
    B_pad = _round_up(B, TB)

    # Pad batch & feature dims; bf16 matmul operands (zero pad cols hit zero
    # weight rows -> no effect).
    x_p = jnp.zeros((B_pad, dp), jnp.float32).at[:B, :d_in].set(x)
    x_p = x_p.astype(jnp.bfloat16)

    # Additive mask, lane-dense 128 wide.  Padded batch rows are fully
    # unmasked (avoids all -inf rows -> NaN); their output is sliced away.
    maskadd = jnp.full((B_pad, LANE), -jnp.inf, jnp.float32)
    maskadd = maskadd.at[:B, :d_out].set(jnp.where(mask_bool, -jnp.inf, 0.0))
    maskadd = maskadd.at[B:, :].set(0.0)
    maskadd = maskadd.astype(jnp.bfloat16)

    out = pl.pallas_call(
        functools.partial(grlmlp_kernel, dp=dp),
        out_shape=jax.ShapeDtypeStruct((B_pad, LANE), jnp.float32),
        grid=(B_pad // TB,),
        in_specs=[
            pl.BlockSpec((TB, dp), lambda i: (i, 0)),              # x tile
            pl.BlockSpec((TB, LANE), lambda i: (i, 0)),            # additive mask tile
            pl.BlockSpec(packed_params.shape, lambda i: (0, 0)),   # params, VMEM-resident
        ],
        out_specs=pl.BlockSpec((TB, LANE), lambda i: (i, 0)),       # lane-dense output
        compiler_params=pltpu.CompilerParams(
            dimension_semantics=("parallel",)),                     # megacore-shard batch
    )(x_p, maskadd, packed_params)

    return out[:B, :d_out]


def _init_linear(key, in_dim, out_dim):
    """PyTorch nn.Linear-like init (U[-1/sqrt(in), 1/sqrt(in)]).

    Returns weight pre-transposed to (in, out) and bias as (1, out), in f32.
    """
    kw, kb = jax.random.split(key)
    bound = 1.0 / (in_dim ** 0.5)
    w_t = jax.random.uniform(kw, (in_dim, out_dim), jnp.float32, -bound, bound)
    b = jax.random.uniform(kb, (1, out_dim), jnp.float32, -bound, bound)
    return w_t, b


def _reference(x, mask_bool, w1t, b1, w2t, b2, w3t, b3, w4t, b4):
    # Mirror the kernel's bf16 quantization of matmul operands so the check
    # isolates kernel bugs rather than bf16 rounding.
    q = lambda a: a.astype(jnp.bfloat16).astype(jnp.float32)
    l1 = _rrelu(q(x) @ q(w1t) + q(b1))
    l2 = _rrelu(q(l1) @ q(w2t) + q(b2))
    l3 = _rrelu(q(l2) @ q(w3t) + q(b3))
    ypred = q(l3) @ q(w4t) + q(b4)
    logits = jnp.where(mask_bool, -jnp.inf, ypred)
    return jax.nn.log_softmax(logits, axis=-1)


if __name__ == "__main__":
    # Small shapes consistent with the module: batch=8, input_dim=32,
    # hidden1=64, hidden2=32, output_dim=16.
    B, D_IN, H1, H2, D_OUT = 8, 32, 64, 32, 16

    root = jax.random.PRNGKey(0)
    kx, kmask, k1, k2, k3, k4 = jax.random.split(root, 6)

    x = jax.random.normal(kx, (B, D_IN), jnp.float32)
    # boolean mask over output logits (True == masked / -inf); keep at least
    # one unmasked logit per row (fully-masked rows are NaN in both kernel and
    # reference, matching PyTorch behavior).
    mask_bool = jax.random.bernoulli(kmask, 0.2, (B, D_OUT))
    mask_bool = mask_bool.at[:, 0].set(False)

    w1t, b1 = _init_linear(k1, D_IN, H1)
    w2t, b2 = _init_linear(k2, H1, H1)
    w3t, b3 = _init_linear(k3, H1, H2)
    w4t, b4 = _init_linear(k4, H2, D_OUT)

    packed = pack_params(w1t, b1, w2t, b2, w3t, b3, w4t, b4)

    out = grlmlp_forward(x, mask_bool, packed, d_out=D_OUT)
    out = jax.block_until_ready(out)
    ref = _reference(x, mask_bool, w1t, b1, w2t, b2, w3t, b3, w4t, b4)

    assert out.shape == (B, D_OUT)
    finite = jnp.isfinite(ref)
    assert bool(jnp.all(jnp.isneginf(out) == jnp.isneginf(ref))), "mask mismatch"
    assert bool(jnp.allclose(jnp.where(finite, out, 0.0),
                             jnp.where(finite, ref, 0.0),
                             atol=2e-3, rtol=2e-3)), "value mismatch"
    # each row is a valid log-distribution
    assert bool(jnp.allclose(jnp.sum(jnp.exp(out), axis=-1), 1.0, atol=1e-3)), \
        "log_softmax normalization mismatch"

    print("KERNEL_OK")
</pallas_src>

<mosaic_0001>
module attributes {stable_mosaic.version = 11 : i64} {
  func.func @grlmlp_kernel(%arg0: i32, %arg1: memref<8x32xbf16, #tpu.memory_space<vmem>>, %arg2: memref<8x128xbf16, #tpu.memory_space<vmem>>, %arg3: memref<424x128xbf16, #tpu.memory_space<vmem>>, %arg4: memref<8x128xf32, #tpu.memory_space<vmem>>) attributes {dimension_semantics = [#tpu.dimension_semantics<parallel>], iteration_bounds = array<i64: 1>, scalar_prefetch = 0 : i64, scratch_operands = 0 : i64, tpu.core_type = #tpu.core_type<tc>, window_params = [{transform_indices = @transform_0, window_bounds = array<i64: 8, 32>}, {transform_indices = @transform_1, window_bounds = array<i64: 8, 128>}, {pipeline_mode = #tpu.pipeline_mode<synchronous>, transform_indices = @transform_2, window_bounds = array<i64: 424, 128>}, {transform_indices = @transform_3, window_bounds = array<i64: 8, 128>}]} {
    %c0 = arith.constant 0 : index
    %c0_0 = arith.constant 0 : index
    %0 = vector.load %arg3[%c0, %c0_0] : memref<424x128xbf16, #tpu.memory_space<vmem>>, vector<32x128xbf16>
    %c32 = arith.constant 32 : index
    %c0_1 = arith.constant 0 : index
    %1 = vector.load %arg3[%c32, %c0_1] : memref<424x128xbf16, #tpu.memory_space<vmem>>, vector<128x128xbf16>
    %c160 = arith.constant 160 : index
    %c0_2 = arith.constant 0 : index
    %2 = vector.load %arg3[%c160, %c0_2] : memref<424x128xbf16, #tpu.memory_space<vmem>>, vector<128x128xbf16>
    %c288 = arith.constant 288 : index
    %c0_3 = arith.constant 0 : index
    %3 = vector.load %arg3[%c288, %c0_3] : memref<424x128xbf16, #tpu.memory_space<vmem>>, vector<128x128xbf16>
    %c416 = arith.constant 416 : index
    %c0_4 = arith.constant 0 : index
    %4 = vector.load %arg3[%c416, %c0_4] : memref<424x128xbf16, #tpu.memory_space<vmem>>, vector<8x128xbf16>
    %5 = arith.extf %4 : vector<8x128xbf16> to vector<8x128xf32>
    %c0_5 = arith.constant 0 : index
    %c0_6 = arith.constant 0 : index
    %6 = vector.load %arg1[%c0_5, %c0_6] : memref<8x32xbf16, #tpu.memory_space<vmem>>, vector<8x32xbf16>
    %cst = arith.constant dense<0.000000e+00> : vector<8x128xf32>
    %7 = tpu.matmul %6, %0, %cst {dimension_numbers = #tpu.dot_dimension_numbers<[1], [0], [0], [1], [0, 0, 1, 1], [], []>} : vector<8x32xbf16>, vector<32x128xbf16>, vector<8x128xf32> -> vector<8x128xf32>
    %8 = vector.extract_strided_slice %5 {offsets = [0, 0], sizes = [1, 128], strides = [1, 1]} : vector<8x128xf32> to vector<1x128xf32>
    %9 = vector.broadcast %8 : vector<1x128xf32> to vector<8x128xf32>
    %10 = arith.addf %7, %9 : vector<8x128xf32>
    %cst_7 = arith.constant 0.000000e+00 : f32
    %11 = vector.broadcast %cst_7 : f32 to vector<8x128xf32>
    %12 = arith.cmpf oge, %10, %11 : vector<8x128xf32>
    %cst_8 = arith.constant 2.000000e-01 : f32
    %13 = vector.broadcast %cst_8 : f32 to vector<8x128xf32>
    %14 = arith.mulf %13, %10 : vector<8x128xf32>
    %15 = arith.select %12, %10, %14 : vector<8x128xi1>, vector<8x128xf32>
    %16 = arith.truncf %15 : vector<8x128xf32> to vector<8x128xbf16>
    %cst_9 = arith.constant dense<0.000000e+00> : vector<8x128xf32>
    %17 = tpu.matmul %16, %1, %cst_9 {dimension_numbers = #tpu.dot_dimension_numbers<[1], [0], [0], [1], [0, 0, 1, 1], [], []>} : vector<8x128xbf16>, vector<128x128xbf16>, vector<8x128xf32> -> vector<8x128xf32>
    %18 = vector.extract_strided_slice %5 {offsets = [1, 0], sizes = [1, 128], strides = [1, 1]} : vector<8x128xf32> to vector<1x128xf32>
    %19 = vector.broadcast %18 : vector<1x128xf32> to vector<8x128xf32>
    %20 = arith.addf %17, %19 : vector<8x128xf32>
    %cst_10 = arith.constant 0.000000e+00 : f32
    %21 = vector.broadcast %cst_10 : f32 to vector<8x128xf32>
    %22 = arith.cmpf oge, %20, %21 : vector<8x128xf32>
    %cst_11 = arith.constant 2.000000e-01 : f32
    %23 = vector.broadcast %cst_11 : f32 to vector<8x128xf32>
    %24 = arith.mulf %23, %20 : vector<8x128xf32>
    %25 = arith.select %22, %20, %24 : vector<8x128xi1>, vector<8x128xf32>
    %26 = arith.truncf %25 : vector<8x128xf32> to vector<8x128xbf16>
    %cst_12 = arith.constant dense<0.000000e+00> : vector<8x128xf32>
    %27 = tpu.matmul %26, %2, %cst_12 {dimension_numbers = #tpu.dot_dimension_numbers<[1], [0], [0], [1], [0, 0, 1, 1], [], []>} : vector<8x128xbf16>, vector<128x128xbf16>, vector<8x128xf32> -> vector<8x128xf32>
    %28 = vector.extract_strided_slice %5 {offsets = [2, 0], sizes = [1, 128], strides = [1, 1]} : vector<8x128xf32> to vector<1x128xf32>
    %29 = vector.broadcast %28 : vector<1x128xf32> to vector<8x128xf32>
    %30 = arith.addf %27, %29 : vector<8x128xf32>
    %cst_13 = arith.constant 0.000000e+00 : f32
    %31 = vector.broadcast %cst_13 : f32 to vector<8x128xf32>
    %32 = arith.cmpf oge, %30, %31 : vector<8x128xf32>
    %cst_14 = arith.constant 2.000000e-01 : f32
    %33 = vector.broadcast %cst_14 : f32 to vector<8x128xf32>
    %34 = arith.mulf %33, %30 : vector<8x128xf32>
    %35 = arith.select %32, %30, %34 : vector<8x128xi1>, vector<8x128xf32>
    %36 = arith.truncf %35 : vector<8x128xf32> to vector<8x128xbf16>
    %cst_15 = arith.constant dense<0.000000e+00> : vector<8x128xf32>
    %37 = tpu.matmul %36, %3, %cst_15 {dimension_numbers = #tpu.dot_dimension_numbers<[1], [0], [0], [1], [0, 0, 1, 1], [], []>} : vector<8x128xbf16>, vector<128x128xbf16>, vector<8x128xf32> -> vector<8x128xf32>
    %38 = vector.extract_strided_slice %5 {offsets = [3, 0], sizes = [1, 128], strides = [1, 1]} : vector<8x128xf32> to vector<1x128xf32>
    %39 = vector.broadcast %38 : vector<1x128xf32> to vector<8x128xf32>
    %40 = arith.addf %37, %39 : vector<8x128xf32>
    %c0_16 = arith.constant 0 : index
    %c0_17 = arith.constant 0 : index
    %41 = vector.load %arg2[%c0_16, %c0_17] : memref<8x128xbf16, #tpu.memory_space<vmem>>, vector<8x128xbf16>
    %42 = arith.extf %41 : vector<8x128xbf16> to vector<8x128xf32>
    %43 = arith.addf %40, %42 : vector<8x128xf32>
    %cst_18 = arith.constant dense<0xFF800000> : vector<8xf32>
    %44 = vector.multi_reduction <maximumf>, %43, %cst_18 [1] : vector<8x128xf32> to vector<8xf32>
    %45 = vector.shape_cast %44 : vector<8xf32> to vector<8x1xf32>
    %46 = vector.broadcast %45 : vector<8x1xf32> to vector<8x128xf32>
    %47 = arith.subf %43, %46 : vector<8x128xf32>
    %48 = math.exp %47 : vector<8x128xf32>
    %cst_19 = arith.constant dense<0.000000e+00> : vector<8xf32>
    %49 = vector.multi_reduction <add>, %48, %cst_19 [1] : vector<8x128xf32> to vector<8xf32>
    %50 = vector.shape_cast %49 : vector<8xf32> to vector<8x1xf32>
    %51 = math.log %50 : vector<8x1xf32>
    %52 = vector.broadcast %51 : vector<8x1xf32> to vector<8x128xf32>
    %53 = arith.subf %47, %52 : vector<8x128xf32>
    %c0_20 = arith.constant 0 : index
    %c0_21 = arith.constant 0 : index
    %54 = vector.load %arg4[%c0_20, %c0_21] : memref<8x128xf32, #tpu.memory_space<vmem>>, vector<8x128xf32>
    tpu.vector_store %arg4[%c0_20, %c0_21], %53 {strides = array<i32>} : memref<8x128xf32, #tpu.memory_space<vmem>>, vector<8x128xf32>,
    return
  }
  func.func @transform_0(%arg0: i32) -> (i32, i32) {
    %c0_i32 = arith.constant 0 : i32
    %c0_i32_0 = arith.constant 0 : i32
    return %arg0, %c0_i32 : i32, i32
  }
  func.func @transform_1(%arg0: i32) -> (i32, i32) {
    %c0_i32 = arith.constant 0 : i32
    %c0_i32_0 = arith.constant 0 : i32
    return %arg0, %c0_i32 : i32, i32
  }
  func.func @transform_2(%arg0: i32) -> (i32, i32) {
    %c0_i32 = arith.constant 0 : i32
    %c0_i32_0 = arith.constant 0 : i32
    %c0_i32_1 = arith.constant 0 : i32
    return %c0_i32, %c0_i32_0 : i32, i32
  }
  func.func @transform_3(%arg0: i32) -> (i32, i32) {
    %c0_i32 = arith.constant 0 : i32
    %c0_i32_0 = arith.constant 0 : i32
    return %arg0, %c0_i32 : i32, i32
  }
}

</mosaic_0001>

<llo_original>
// kernel: grlmlp_forward.1
$region0: #{grlmlp_forward.1}
  #allocation0 [shape = 'u32[]', space=smem, size = 0x4, offset = 0x4, fixed_abs, tag = 'smem constant byte address 0x4 - core index']
  #allocation1 [shape = 'u32[144,128]{1,0:T(1,128)}', space=vmem, size = 0x12000, scoped, tag = 'internal scratch']
  %s0 = inlined_call_operand.vmem [shape: bf16[8,32], index: 0, kind: input, shape index: {}]
  %s1 = inlined_call_operand.vmem [shape: bf16[8,128], index: 1, kind: input, shape index: {}]
  %s2 = inlined_call_operand.hbm [shape: bf16[424,128], index: 2, kind: input, shape index: {}]
  %s3 = inlined_call_operand.hbm [shape: f32[8,128], index: 3, kind: output, shape index: {}]
  %s4 = sld [smem:[#allocation0]]
  $region26: #{grlmlp_forward.1} parent=0
    _
  %s6 = ssub.s32 1, %s4
  %s7 = scalar_select 0, %s6, %s4
  $region1: #{grlmlp_forward.1} parent=0
    #allocation2 [shape = 'u8[108544]{0}', space=vmem, size = 0x1a800, scoped, tag = 'input window, operand 2, single buffered']
    #allocation3 [shape = 's32[1]{0}', space=sflag, size = 0x4, scoped, tag = 'scoped memory for grlmlp_forward.1']
    #allocation4 [shape = 's32[1]{0}', space=sflag, size = 0x4, scoped, tag = 'scoped memory for grlmlp_forward.1']
    #allocation5 [shape = 'u8[4096]{0}', space=vmem, size = 0x1000, scoped, tag = 'output window, operand 0, single buffered']
    %8 = vsyncpa [#allocation3], 0
    %9 = vsyncpa [#allocation4], 0
    // Predicated region
    $region2: #{grlmlp_forward.1} parent=1 // pred_check
      _
    $region3: #{grlmlp_forward.1} parent=1 // pred_check_branch
      %11 = sbr.rel (0) target = $region5
    $region4: #{grlmlp_forward.1} parent=1 // pred_region
      _
    $region5: #{grlmlp_forward.1} parent=1 // pred_fallthru
      _
    // Predicated region
    $region6: #{grlmlp_forward.1} parent=1 // pred_check
      _
    $region7: #{grlmlp_forward.1} parent=1 // pred_check_branch
      %13 = sbr.rel (0) target = $region9
    $region8: #{grlmlp_forward.1} parent=1 // pred_region
      _
    $region9: #{grlmlp_forward.1} parent=1 // pred_fallthru
      _
    // Predicated region
    $region10: #{grlmlp_forward.1} parent=1 // pred_check
      _
    $region11: #{grlmlp_forward.1} parent=1 // pred_check_branch
      %15 = sbr.rel (0) target = $region13
    $region12: #{grlmlp_forward.1} parent=1 // pred_region
      %s17 = ssub.s32 3392, 3392
      %18 = vsyncadd [#allocation3], %s17
      %s19 = sshll.u32 [#allocation2], 4
      %s20 = int_to_ptr.vmem [resolvable:$true] %s19
      %25 = dma.hbm_to_vmem [thread:$0]  %s2, 3392, %s20, [#allocation3], 64, 64, 4
    $region13: #{grlmlp_forward.1} parent=1 // pred_fallthru
      _
    // Predicated region
    $region14: #{grlmlp_forward.1} parent=1 // pred_check
      _
    $region15: #{grlmlp_forward.1} parent=1 // pred_check_branch
      %27 = sbr.rel (0) target = $region17
    $region16: #{grlmlp_forward.1} parent=1 // pred_region
      %28 = dma.done [#allocation3], 3392
    $region17: #{grlmlp_forward.1} parent=1 // pred_fallthru
      _
    %v30 = vld [vmem:[#allocation2] sm:$0xf]
    %v31 = vld [vmem:[#allocation2 + $0x4] sm:$0xf]
    %v32 = vld [vmem:[#allocation2 + $0x8] sm:$0xf]
    %v33 = vld [vmem:[#allocation2 + $0xc] sm:$0xf]
    %v34 = vld [vmem:[#allocation2 + $0x10] sm:$0xf]
    %v35 = vld [vmem:[#allocation2 + $0x14] sm:$0xf]
    %v36 = vld [vmem:[#allocation2 + $0x18] sm:$0xf]
    %v37 = vld [vmem:[#allocation2 + $0x1c] sm:$0xf]
    %v38 = vld [vmem:[#allocation2 + $0x20] sm:$0xf]
    %v39 = vld [vmem:[#allocation2 + $0x24] sm:$0xf]
    %v40 = vld [vmem:[#allocation2 + $0x28] sm:$0xf]
    %v41 = vld [vmem:[#allocation2 + $0x2c] sm:$0xf]
    %v42 = vld [vmem:[#allocation2 + $0x30] sm:$0xf]
    %v43 = vld [vmem:[#allocation2 + $0x34] sm:$0xf]
    %v44 = vld [vmem:[#allocation2 + $0x38] sm:$0xf]
    %v45 = vld [vmem:[#allocation2 + $0x3c] sm:$0xf]
    %v46 = vld [vmem:[#allocation2 + $0x40] sm:$0xf]
    %v47 = vld [vmem:[#allocation2 + $0x44] sm:$0xf]
    %v48 = vld [vmem:[#allocation2 + $0x48] sm:$0xf]
    %v49 = vld [vmem:[#allocation2 + $0x4c] sm:$0xf]
    %v50 = vld [vmem:[#allocation2 + $0x50] sm:$0xf]
    %v51 = vld [vmem:[#allocation2 + $0x54] sm:$0xf]
    %v52 = vld [vmem:[#allocation2 + $0x58] sm:$0xf]
    %v53 = vld [vmem:[#allocation2 + $0x5c] sm:$0xf]
    %v54 = vld [vmem:[#allocation2 + $0x60] sm:$0xf]
    %v55 = vld [vmem:[#allocation2 + $0x64] sm:$0xf]
    %v56 = vld [vmem:[#allocation2 + $0x68] sm:$0xf]
    %v57 = vld [vmem:[#allocation2 + $0x6c] sm:$0xf]
    %v58 = vld [vmem:[#allocation2 + $0x70] sm:$0xf]
    %v59 = vld [vmem:[#allocation2 + $0x74] sm:$0xf]
    %v60 = vld [vmem:[#allocation2 + $0x78] sm:$0xf]
    %v61 = vld [vmem:[#allocation2 + $0x7c] sm:$0xf]
    %v62 = vld [vmem:[#allocation2 + $0x80] sm:$0xf]
    %v63 = vld [vmem:[#allocation2 + $0x84] sm:$0xf]
    %v64 = vld [vmem:[#allocation2 + $0x88] sm:$0xf]
    %v65 = vld [vmem:[#allocation2 + $0x8c] sm:$0xf]
    %v66 = vld [vmem:[#allocation2 + $0x90] sm:$0xf]
    %v67 = vld [vmem:[#allocation2 + $0x94] sm:$0xf]
    %v68 = vld [vmem:[#allocation2 + $0x98] sm:$0xf]
    %v69 = vld [vmem:[#allocation2 + $0x9c] sm:$0xf]
    %v70 = vld [vmem:[#allocation2 + $0xa0] sm:$0xf]
    %v71 = vld [vmem:[#allocation2 + $0xa4] sm:$0xf]
    %v72 = vld [vmem:[#allocation2 + $0xa8] sm:$0xf]
    %v73 = vld [vmem:[#allocation2 + $0xac] sm:$0xf]
    %v74 = vld [vmem:[#allocation2 + $0xb0] sm:$0xf]
    %v75 = vld [vmem:[#allocation2 + $0xb4] sm:$0xf]
    %v76 = vld [vmem:[#allocation2 + $0xb8] sm:$0xf]
    %v77 = vld [vmem:[#allocation2 + $0xbc] sm:$0xf]
    %v78 = vld [vmem:[#allocation2 + $0xc0] sm:$0xf]
    %v79 = vld [vmem:[#allocation2 + $0xc4] sm:$0xf]
    %v80 = vld [vmem:[#allocation2 + $0xc8] sm:$0xf]
    %v81 = vld [vmem:[#allocation2 + $0xcc] sm:$0xf]
    %v82 = vld [vmem:[#allocation2 + $0xd0] sm:$0xf]
    %v83 = vunpack.c.l.bf16 %v82
    %v84 = vld [vmem:[%s0] sm:$0xf]
    %v85 = vlaneseq
    %v86 = vshrl.u32 %v85, 7
    %v87 = vsub.s32 0, %v86
    %v88 = vrot.slane %v83, %v87
    %v93 = vunpack.c.l.b16 %v30
    %v94 = vunpack.c.l.b16 %v31
    %v95 = vunpack.c.l.b16 %v32
    %v96 = vunpack.c.l.b16 %v33
    %v97 = vpack.c.b16 %v94, %v93
    %v98 = vpack.c.b16 %v96, %v95
    %vm101 = vcmask 261120
    %v103 = vsel %vm101, %v84, 0
    %105 = vmatprep.subr.bf16.mxu0 0
    %106 = vmatpush1.bf16.msra.mxu0 %v97
    %107 = vmatprep.subr.bf16.mxu0 0
    %108 = vmatpush1.bf16.msra.mxu0 %v98
    %109 = vmatprep.subr.bf16.mxu0 0
    %110 = vmatpush1.bf16.msra.mxu0 0
    %111 = vmatprep.subr.bf16.mxu0 0
    %112 = vmatpush1.bf16.msra.mxu0 0
    %113 = vmatprep.subr.bf16.mxu0 0
    %114 = vmatpush1.bf16.msra.mxu0 0
    %115 = vmatprep.subr.bf16.mxu0 0
    %116 = vmatpush1.bf16.msra.mxu0 0
    %117 = vmatprep.subr.bf16.mxu0 0
    %118 = vmatpush1.bf16.msra.mxu0 0
    %119 = vmatprep.subr.bf16.mxu0 0
    %120 = vmatpush1.bf16.msra.mxu0 0
    %121 = vmatprep.subr.bf16.mxu0 0
    %122 = vmatpush1.bf16.msra.mxu0 0
    %123 = vmatprep.subr.bf16.mxu0 0
    %124 = vmatpush1.bf16.msra.mxu0 0
    %125 = vmatprep.subr.bf16.mxu0 0
    %126 = vmatpush1.bf16.msra.mxu0 0
    %127 = vmatprep.subr.bf16.mxu0 0
    %128 = vmatpush1.bf16.msra.mxu0 0
    %129 = vmatprep.subr.bf16.mxu0 0
    %130 = vmatpush1.bf16.msra.mxu0 0
    %131 = vmatprep.subr.bf16.mxu0 0
    %132 = vmatpush1.bf16.msra.mxu0 0
    %133 = vmatprep.subr.bf16.mxu0 0
    %134 = vmatpush1.bf16.msra.mxu0 0
    %135 = vmatprep.subr.bf16.mxu0 0
    %136 = vmatpush1.bf16.msra.mxu0 0
    %137 = vmatprep.mubr.bf16.mxu0 0
    %138 = vmatmul.mubr.bf16.gmra.mrb[0].mxu0 %v103
    %v139 = vpop.f32.mrb[0].mxu0
    %v140 = vadd.f32 %v88, %v139
    %v141 = vpop.f32.mrb[0].mxu0
    %v142 = vpop.f32.mrb[0].mxu0
    %v143 = vpop.f32.mrb[0].mxu0
    %144 = vdwg.mxu0
    %vm145 = vcmp.ge.f32.partialorder %v140, 0.0
    %v146 = vmul.f32 %v140, 0.2
    %v147 = vsel %vm145, %v140, %v146
    %v148 = vpack.c.bf16 %v147, %v147
    %v149 = vlaneseq
    %v150 = vshrl.u32 %v149, 7
    %v151 = vsub.s32 1, %v150
    %v152 = vrot.slane %v83, %v151
    %v169 = vunpack.c.l.b16 %v34
    %v170 = vunpack.c.l.b16 %v35
    %v171 = vunpack.c.l.b16 %v36
    %v172 = vunpack.c.l.b16 %v37
    %v173 = vunpack.c.l.b16 %v38
    %v174 = vunpack.c.l.b16 %v39
    %v175 = vunpack.c.l.b16 %v40
    %v176 = vunpack.c.l.b16 %v41
    %v177 = vunpack.c.l.b16 %v42
    %v178 = vunpack.c.l.b16 %v43
    %v179 = vunpack.c.l.b16 %v44
    %v180 = vunpack.c.l.b16 %v45
    %v181 = vunpack.c.l.b16 %v46
    %v182 = vunpack.c.l.b16 %v47
    %v183 = vunpack.c.l.b16 %v48
    %v184 = vunpack.c.l.b16 %v49
    %v185 = vpack.c.b16 %v170, %v169
    %v186 = vpack.c.b16 %v172, %v171
    %v187 = vpack.c.b16 %v174, %v173
    %v188 = vpack.c.b16 %v176, %v175
    %v189 = vpack.c.b16 %v178, %v177
    %v190 = vpack.c.b16 %v180, %v179
    %v191 = vpack.c.b16 %v182, %v181
    %v192 = vpack.c.b16 %v184, %v183
    %201 = vmatprep.subr.bf16.mxu0 0
    %202 = vmatpush1.bf16.msra.mxu0 %v185
    %203 = vmatprep.subr.bf16.mxu0 0
    %204 = vmatpush1.bf16.msra.mxu0 %v186
    %205 = vmatprep.subr.bf16.mxu0 0
    %206 = vmatpush1.bf16.msra.mxu0 %v187
    %207 = vmatprep.subr.bf16.mxu0 0
    %208 = vmatpush1.bf16.msra.mxu0 %v188
    %209 = vmatprep.subr.bf16.mxu0 0
    %210 = vmatpush1.bf16.msra.mxu0 %v189
    %211 = vmatprep.subr.bf16.mxu0 0
    %212 = vmatpush1.bf16.msra.mxu0 %v190
    %213 = vmatprep.subr.bf16.mxu0 0
    %214 = vmatpush1.bf16.msra.mxu0 %v191
    %215 = vmatprep.subr.bf16.mxu0 0
    %216 = vmatpush1.bf16.msra.mxu0 %v192
    %217 = vmatprep.subr.bf16.mxu0 0
    %218 = vmatpush1.bf16.msra.mxu0 0
    %219 = vmatprep.subr.bf16.mxu0 0
    %220 = vmatpush1.bf16.msra.mxu0 0
    %221 = vmatprep.subr.bf16.mxu0 0
    %222 = vmatpush1.bf16.msra.mxu0 0
    %223 = vmatprep.subr.bf16.mxu0 0
    %224 = vmatpush1.bf16.msra.mxu0 0
    %225 = vmatprep.subr.bf16.mxu0 0
    %226 = vmatpush1.bf16.msra.mxu0 0
    %227 = vmatprep.subr.bf16.mxu0 0
    %228 = vmatpush1.bf16.msra.mxu0 0
    %229 = vmatprep.subr.bf16.mxu0 0
    %230 = vmatpush1.bf16.msra.mxu0 0
    %231 = vmatprep.subr.bf16.mxu0 0
    %232 = vmatpush1.bf16.msra.mxu0 0
    %233 = vmatprep.mubr.bf16.mxu0 0
    %234 = vmatmul.mubr.bf16.gmra.mrb[0].mxu0 %v148
    %v235 = vpop.f32.mrb[0].mxu0
    %v236 = vadd.f32 %v152, %v235
    %v237 = vpop.f32.mrb[0].mxu0
    %v238 = vpop.f32.mrb[0].mxu0
    %v239 = vpop.f32.mrb[0].mxu0
    %240 = vdwg.mxu0
    %vm241 = vcmp.ge.f32.partialorder %v236, 0.0
    %v242 = vmul.f32 %v236, 0.2
    %v243 = vsel %vm241, %v236, %v242
    %v244 = vpack.c.bf16 %v243, %v243
    %v245 = vlaneseq
    %v246 = vshrl.u32 %v245, 7
    %v247 = vsub.s32 2, %v246
    %v248 = vrot.slane %v83, %v247
    %v265 = vunpack.c.l.b16 %v50
    %v266 = vunpack.c.l.b16 %v51
    %v267 = vunpack.c.l.b16 %v52
    %v268 = vunpack.c.l.b16 %v53
    %v269 = vunpack.c.l.b16 %v54
    %v270 = vunpack.c.l.b16 %v55
    %v271 = vunpack.c.l.b16 %v56
    %v272 = vunpack.c.l.b16 %v57
    %v273 = vunpack.c.l.b16 %v58
    %v274 = vunpack.c.l.b16 %v59
    %v275 = vunpack.c.l.b16 %v60
    %v276 = vunpack.c.l.b16 %v61
    %v277 = vunpack.c.l.b16 %v62
    %v278 = vunpack.c.l.b16 %v63
    %v279 = vunpack.c.l.b16 %v64
    %v280 = vunpack.c.l.b16 %v65
    %v281 = vpack.c.b16 %v266, %v265
    %v282 = vpack.c.b16 %v268, %v267
    %v283 = vpack.c.b16 %v270, %v269
    %v284 = vpack.c.b16 %v272, %v271
    %v285 = vpack.c.b16 %v274, %v273
    %v286 = vpack.c.b16 %v276, %v275
    %v287 = vpack.c.b16 %v278, %v277
    %v288 = vpack.c.b16 %v280, %v279
    %297 = vmatprep.subr.bf16.mxu0 0
    %298 = vmatpush1.bf16.msra.mxu0 %v281
    %299 = vmatprep.subr.bf16.mxu0 0
    %300 = vmatpush1.bf16.msra.mxu0 %v282
    %301 = vmatprep.subr.bf16.mxu0 0
    %302 = vmatpush1.bf16.msra.mxu0 %v283
    %303 = vmatprep.subr.bf16.mxu0 0
    %304 = vmatpush1.bf16.msra.mxu0 %v284
    %305 = vmatprep.subr.bf16.mxu0 0
    %306 = vmatpush1.bf16.msra.mxu0 %v285
    %307 = vmatprep.subr.bf16.mxu0 0
    %308 = vmatpush1.bf16.msra.mxu0 %v286
    %309 = vmatprep.subr.bf16.mxu0 0
    %310 = vmatpush1.bf16.msra.mxu0 %v287
    %311 = vmatprep.subr.bf16.mxu0 0
    %312 = vmatpush1.bf16.msra.mxu0 %v288
    %313 = vmatprep.subr.bf16.mxu0 0
    %314 = vmatpush1.bf16.msra.mxu0 0
    %315 = vmatprep.subr.bf16.mxu0 0
    %316 = vmatpush1.bf16.msra.mxu0 0
    %317 = vmatprep.subr.bf16.mxu0 0
    %318 = vmatpush1.bf16.msra.mxu0 0
    %319 = vmatprep.subr.bf16.mxu0 0
    %320 = vmatpush1.bf16.msra.mxu0 0
    %321 = vmatprep.subr.bf16.mxu0 0
    %322 = vmatpush1.bf16.msra.mxu0 0
    %323 = vmatprep.subr.bf16.mxu0 0
    %324 = vmatpush1.bf16.msra.mxu0 0
    %325 = vmatprep.subr.bf16.mxu0 0
    %326 = vmatpush1.bf16.msra.mxu0 0
    %327 = vmatprep.subr.bf16.mxu0 0
    %328 = vmatpush1.bf16.msra.mxu0 0
    %329 = vmatprep.mubr.bf16.mxu0 0
    %330 = vmatmul.mubr.bf16.gmra.mrb[0].mxu0 %v244
    %v331 = vpop.f32.mrb[0].mxu0
    %v332 = vadd.f32 %v248, %v331
    %v333 = vpop.f32.mrb[0].mxu0
    %v334 = vpop.f32.mrb[0].mxu0
    %v335 = vpop.f32.mrb[0].mxu0
    %336 = vdwg.mxu0
    %vm337 = vcmp.ge.f32.partialorder %v332, 0.0
    %v338 = vmul.f32 %v332, 0.2
    %v339 = vsel %vm337, %v332, %v338
    %v340 = vpack.c.bf16 %v339, %v339
    %v341 = vlaneseq
    %v342 = vshrl.u32 %v341, 7
    %v343 = vsub.s32 3, %v342
    %v344 = vrot.slane %v83, %v343
    %v361 = vunpack.c.l.b16 %v66
    %v362 = vunpack.c.l.b16 %v67
    %v363 = vunpack.c.l.b16 %v68
    %v364 = vunpack.c.l.b16 %v69
    %v365 = vunpack.c.l.b16 %v70
    %v366 = vunpack.c.l.b16 %v71
    %v367 = vunpack.c.l.b16 %v72
    %v368 = vunpack.c.l.b16 %v73
    %v369 = vunpack.c.l.b16 %v74
    %v370 = vunpack.c.l.b16 %v75
    %v371 = vunpack.c.l.b16 %v76
    %v372 = vunpack.c.l.b16 %v77
    %v373 = vunpack.c.l.b16 %v78
    %v374 = vunpack.c.l.b16 %v79
    %v375 = vunpack.c.l.b16 %v80
    %v376 = vunpack.c.l.b16 %v81
    %v377 = vpack.c.b16 %v362, %v361
    %v378 = vpack.c.b16 %v364, %v363
    %v379 = vpack.c.b16 %v366, %v365
    %v380 = vpack.c.b16 %v368, %v367
    %v381 = vpack.c.b16 %v370, %v369
    %v382 = vpack.c.b16 %v372, %v371
    %v383 = vpack.c.b16 %v374, %v373
    %v384 = vpack.c.b16 %v376, %v375
    %393 = vmatprep.subr.bf16.mxu0 0
    %394 = vmatpush1.bf16.msra.mxu0 %v377
    %395 = vmatprep.subr.bf16.mxu0 0
    %396 = vmatpush1.bf16.msra.mxu0 %v378
    %397 = vmatprep.subr.bf16.mxu0 0
    %398 = vmatpush1.bf16.msra.mxu0 %v379
    %399 = vmatprep.subr.bf16.mxu0 0
    %400 = vmatpush1.bf16.msra.mxu0 %v380
    %401 = vmatprep.subr.bf16.mxu0 0
    %402 = vmatpush1.bf16.msra.mxu0 %v381
    %403 = vmatprep.subr.bf16.mxu0 0
    %404 = vmatpush1.bf16.msra.mxu0 %v382
    %405 = vmatprep.subr.bf16.mxu0 0
    %406 = vmatpush1.bf16.msra.mxu0 %v383
    %407 = vmatprep.subr.bf16.mxu0 0
    %408 = vmatpush1.bf16.msra.mxu0 %v384
    %409 = vmatprep.subr.bf16.mxu0 0
    %410 = vmatpush1.bf16.msra.mxu0 0
    %411 = vmatprep.subr.bf16.mxu0 0
    %412 = vmatpush1.bf16.msra.mxu0 0
    %413 = vmatprep.subr.bf16.mxu0 0
    %414 = vmatpush1.bf16.msra.mxu0 0
    %415 = vmatprep.subr.bf16.mxu0 0
    %416 = vmatpush1.bf16.msra.mxu0 0
    %417 = vmatprep.subr.bf16.mxu0 0
    %418 = vmatpush1.bf16.msra.mxu0 0
    %419 = vmatprep.subr.bf16.mxu0 0
    %420 = vmatpush1.bf16.msra.mxu0 0
    %421 = vmatprep.subr.bf16.mxu0 0
    %422 = vmatpush1.bf16.msra.mxu0 0
    %423 = vmatprep.subr.bf16.mxu0 0
    %424 = vmatpush1.bf16.msra.mxu0 0
    %425 = vmatprep.mubr.bf16.mxu0 0
    %426 = vmatmul.mubr.bf16.gmra.mrb[0].mxu0 %v340
    %v427 = vpop.f32.mrb[0].mxu0
    %v428 = vadd.f32 %v344, %v427
    %v429 = vpop.f32.mrb[0].mxu0
    %v430 = vpop.f32.mrb[0].mxu0
    %v431 = vpop.f32.mrb[0].mxu0
    %432 = vdwg.mxu0
    %v433 = vld [vmem:[%s1] sm:$0xf]
    %v434 = vunpack.c.l.bf16 %v433
    %v435 = vadd.f32 %v428, %v434
    %436 = vmax.xlane.f32.xlu0 %v435
    %v437 = vpop.xlane.xlu0 %436
    %v438 = vsub.f32 %v435, %v437
    %v439 = vmul.f32 %v438, 1.442695
    %v440 = vpow.pop %v439
    %441 = vadd.xlane.f32.xlu0 %v440
    %v442 = vpop.xlane.xlu0 %441
    %v443 = vlog2.pop %v442
    %v444 = vmul.f32 %v443, 0.6931472
    %v445 = vsub.f32 %v438, %v444
    %446 = vst [vmem:[#allocation5] sm:$0xff] %v445
    // Predicated region
    $region18: #{grlmlp_forward.1} parent=1 // pred_check
      _
    $region19: #{grlmlp_forward.1} parent=1 // pred_check_branch
      %448 = sbr.rel (0) target = $region21
    $region20: #{grlmlp_forward.1} parent=1 // pred_region
      %s450 = ssub.s32 128, 128
      %451 = vsyncadd [#allocation4], %s450
      %s453 = sshll.u32 [#allocation5], 4
      %s454 = int_to_ptr.vmem [resolvable:$true] %s453
      %456 = dma.vmem_to_hbm [thread:$0]  %s454, 128, %s3, [#allocation4]
    $region21: #{grlmlp_forward.1} parent=1 // pred_fallthru
      _
    // Predicated region
    $region22: #{grlmlp_forward.1} parent=1 // pred_check
      _
    $region23: #{grlmlp_forward.1} parent=1 // pred_check_branch
      %458 = sbr.rel (0) target = $region25
    $region24: #{grlmlp_forward.1} parent=1 // pred_region
      %459 = dma.done [#allocation4], 128
    $region25: #{grlmlp_forward.1} parent=1 // pred_fallthru
      _
    %460 = vsyncpa [#allocation3], 1
    %461 = vsyncpa [#allocation4], 1

</llo_original>
